<compile_context>
chip_gen: v7x
topology: tpu7x:2x2x1
jax: 0.10.0
libtpu: 0.0.40
codegen_flags: <defaults>
</compile_context>

<pallas_src>
import functools

import jax
import jax.numpy as jnp
from jax.experimental import pallas as pl
from jax.experimental.pallas import tpu as pltpu

COLORMAP = ((0, 0, 0), (10, 0, 255), (0, 112, 255), (255, 0, 255), (0, 255, 163),
            (224, 255, 8), (8, 255, 214), (255, 194, 7), (255, 0, 0),
            (140, 140, 140), (255, 0, 20), (204, 70, 3), (80, 50, 50),
            (0, 255, 41), (224, 5, 255), (160, 150, 20), (150, 5, 61),
            (255, 5, 153), (0, 255, 61))
MAX_DISP = 192


def _pack_colormap(colormap):
    """Pack (r, g, b) -> single int key, as static Python ints (compile-time)."""
    return tuple(int(r) * 65536 + int(g) * 256 + int(b) for (r, g, b) in colormap)


def _pick_row_tile(H, W, K, dtype_bytes, target_bytes=4 << 20, max_tile=512):
    """Rows per block so the OUTPUT block (K * th * W * dtype) is <= ~4 MiB.

    Keeps double-buffered VMEM use well under the default scoped limits
    (16 MiB v5e / 32 MiB v6e+v7x) and v7x's 64 MiB physical VMEM, while staying
    big enough (~MBs) to sit near the HBM roofline.  th is a multiple of the
    dtype's sublane packing (32 for int8, 8 for f32) unless it covers the full
    H extent, so the BlockSpec alignment rule is always satisfied.
    """
    mult = {1: 32, 2: 16}.get(dtype_bytes, 8)
    per_row = max(1, K * W * dtype_bytes)
    th = min(max_tile, target_bytes // per_row)
    th = max((th // mult) * mult, mult)
    if th >= H:
        return H          # full extent: always a legal block shape
    return th


# ---------------------------------------------------------------------------
# Kernel 1: packed-label -> one-hot
#   input : (B, H, W) int32 packed color key (r*65536 + g*256 + b)
#   output: (B, K, H, W) one-hot (uint8 by default; values identical to the
#           torch float32 reference).
#   grid  : (B, cdiv(H, th)); each grid point reads ONE (th, W) label tile and
#           writes all K planes for that tile.
# ---------------------------------------------------------------------------
def _label_to_onehot_kernel(keys_ref, out_ref, *, cmap_keys):
    lab = keys_ref[...]                          # (th, W) int32 -- read once
    for k, ck in enumerate(cmap_keys):           # static unrolled K=19 loop
        out_ref[k, :, :] = (lab == ck).astype(out_ref.dtype)


@functools.partial(jax.jit, static_argnames=("cmap_keys", "out_dtype"))
def _label_to_onehot_impl(labels_bhwc, *, cmap_keys, out_dtype):
    B, H, W, _ = labels_bhwc.shape
    K = len(cmap_keys)

    # Pack RGB into one int32 key.  Labels are exact integer-valued colors per
    # the data contract, so the integer compare is exact (aliasing only if a
    # channel were outside [0, 255], which the contract forbids).
    lab = labels_bhwc.astype(jnp.int32)
    keys = lab[..., 0] * 65536 + lab[..., 1] * 256 + lab[..., 2]      # (B, H, W)

    th = _pick_row_tile(H, W, K, jnp.dtype(out_dtype).itemsize)
    grid = (B, pl.cdiv(H, th))                    # edge H-block masked by Pallas
    kern = functools.partial(_label_to_onehot_kernel, cmap_keys=cmap_keys)

    return pl.pallas_call(
        kern,
        out_shape=jax.ShapeDtypeStruct((B, K, H, W), out_dtype),
        grid=grid,
        in_specs=[pl.BlockSpec((pl.Squeezed(), th, W),
                               lambda b, h: (b, h, 0))],
        out_specs=pl.BlockSpec((pl.Squeezed(), K, th, W),
                               lambda b, h: (b, 0, h, 0)),
        compiler_params=pltpu.CompilerParams(
            # No accumulation anywhere: both axes parallel (v7x megacore can
            # split the H-tiles across its 2 TCs even when B is 1-2).
            dimension_semantics=("parallel", "parallel"),
            # Let XLA fuse the RGB->key pack into the pallas_call input copy,
            # avoiding the HBM round-trip of the packed `keys` array.
            allow_input_fusion=[True],
        ),
    )(keys)


def label_to_onehot(labels_bhwc, colormap=COLORMAP, out_dtype=jnp.uint8):
    """(B, H, W, 3) exact color labels -> (B, K, H, W) one-hot map."""
    return _label_to_onehot_impl(labels_bhwc,
                                 cmap_keys=_pack_colormap(colormap),
                                 out_dtype=out_dtype)


# ---------------------------------------------------------------------------
# Kernel 2: disparity validity mask  (from prepare_inputs)
#   mask = (disp_gt < max_disp) & (disp_gt > 0)
#   disp flattened to (B*H, W), fixed 256-row tile + cdiv grid, int8 output.
# ---------------------------------------------------------------------------
def _disp_mask_kernel(disp_ref, out_ref, *, max_disp):
    d = disp_ref[...]
    out_ref[...] = jnp.logical_and(d < max_disp, d > 0.0).astype(jnp.int8)


@functools.partial(jax.jit, static_argnames=("max_disp",))
def _disp_valid_mask_i8(disp, *, max_disp):
    B, H, W = disp.shape
    rows = B * H
    disp2 = disp.reshape(rows, W)                 # metadata-only reshape
    tr = 256 if rows > 256 else rows              # fixed tile; edge block masked
    kern = functools.partial(_disp_mask_kernel, max_disp=float(max_disp))
    out = pl.pallas_call(
        kern,
        out_shape=jax.ShapeDtypeStruct((rows, W), jnp.int8),
        grid=(pl.cdiv(rows, tr),),
        in_specs=[pl.BlockSpec((tr, W), lambda i: (i, 0))],
        out_specs=pl.BlockSpec((tr, W), lambda i: (i, 0)),
        compiler_params=pltpu.CompilerParams(
            dimension_semantics=("parallel",)),
    )(disp2)
    return out.reshape(B, H, W)


def disp_valid_mask(disp, max_disp=MAX_DISP, as_bool=True):
    m_i8 = _disp_valid_mask_i8(disp, max_disp=float(max_disp))
    if as_bool:
        # TODO(synk): emit bool directly from the kernel once Mosaic bool
        # memrefs are universally supported; this single int8->bool cast is
        # kept only for torch `mask` dtype fidelity.  Pass as_bool=False to
        # consume the kernel's int8 mask with no extra pass.
        return m_i8.astype(jnp.bool_)
    return m_i8


# ---------------------------------------------------------------------------
# prepare_inputs equivalent (the concrete part of BaseModel_mul)
# ---------------------------------------------------------------------------
def prepare_inputs(inputs, colormap=COLORMAP, max_disp=MAX_DISP,
                   apply_max_disp=True, seg_dtype=jnp.uint8):
    processed = {'ref_img': inputs['left'], 'tgt_img': inputs['right']}
    if 'disp' in inputs:
        disp_gt = inputs['disp']
        if apply_max_disp:
            mask = disp_valid_mask(disp_gt, max_disp)
        else:
            mask = disp_gt > 0
        processed.update({'disp_gt': disp_gt, 'mask': mask})
    if 'labels' in inputs:
        processed['seg_labels'] = label_to_onehot(inputs['labels'], colormap,
                                                  seg_dtype)
    processed['index'] = inputs.get('index', None)
    return processed


# ---------------------------------------------------------------------------
# Pure-JAX references for correctness checks
# ---------------------------------------------------------------------------
def _label_to_onehot_ref(labels_bhwc, colormap):
    cmap = jnp.asarray(colormap, dtype=labels_bhwc.dtype)          # (K, 3)
    eq = labels_bhwc[:, :, :, None, :] == cmap[None, None, None, :, :]
    onehot = jnp.all(eq, axis=-1).astype(jnp.float32)              # (B, H, W, K)
    return jnp.transpose(onehot, (0, 3, 1, 2))                     # (B, K, H, W)


def _disp_mask_ref(disp, max_disp):
    return jnp.logical_and(disp < max_disp, disp > 0)


if __name__ == "__main__":
    key = jax.random.PRNGKey(0)
    k1, k2, k3, k4 = jax.random.split(key, 4)

    B, C, H, W = 2, 3, 16, 16
    K = len(COLORMAP)
    cmap_arr = jnp.asarray(COLORMAP, dtype=jnp.int32)              # (K, 3)

    # Stereo pair (NCHW like the torch module's inputs)
    left = jax.random.normal(k1, (B, C, H, W), dtype=jnp.float32)
    right = jax.random.normal(k2, (B, C, H, W), dtype=jnp.float32)

    # Disparity GT, includes invalid (<=0) and too-large values
    disp = jax.random.uniform(k3, (B, H, W), minval=-20.0, maxval=300.0,
                              dtype=jnp.float32)

    # Segmentation color labels: pick a class per pixel, map to its RGB color
    class_idx = jax.random.randint(k4, (B, H, W), 0, K)
    labels = cmap_arr[class_idx].astype(jnp.float32)               # (B, H, W, 3)

    inputs = {'left': left, 'right': right, 'disp': disp,
              'labels': labels, 'index': 0}

    processed = prepare_inputs(inputs)
    jax.block_until_ready(processed['seg_labels'])
    jax.block_until_ready(processed['mask'])

    # Correctness checks against pure-JAX references
    seg_ref = _label_to_onehot_ref(labels, COLORMAP)
    mask_ref = _disp_mask_ref(disp, MAX_DISP)

    # Default (uint8) one-hot: values identical to the torch float32 map.
    assert processed['seg_labels'].shape == (B, K, H, W)
    assert processed['seg_labels'].dtype == jnp.uint8
    assert bool(jnp.all(processed['seg_labels'].astype(jnp.float32) == seg_ref))

    # Exact torch-dtype path (float32) also available and exact.
    seg_f32 = label_to_onehot(labels, COLORMAP, out_dtype=jnp.float32)
    jax.block_until_ready(seg_f32)
    assert seg_f32.dtype == jnp.float32
    assert bool(jnp.all(seg_f32 == seg_ref))

    # Disparity validity mask (bool, torch semantics)
    assert processed['mask'].dtype == jnp.bool_
    assert bool(jnp.all(processed['mask'] == mask_ref))

    print("KERNEL_OK")
</pallas_src>

<mosaic_0001>
module attributes {stable_mosaic.version = 11 : i64} {
  func.func @_disp_mask_kernel(%arg0: i32, %arg1: memref<32x16xf32, #tpu.memory_space<vmem>>, %arg2: memref<32x16xi8, #tpu.memory_space<vmem>>) attributes {dimension_semantics = [#tpu.dimension_semantics<parallel>], iteration_bounds = array<i64: 1>, scalar_prefetch = 0 : i64, scratch_operands = 0 : i64, tpu.core_type = #tpu.core_type<tc>, window_params = [{transform_indices = @transform_0, window_bounds = array<i64: 32, 16>}, {transform_indices = @transform_1, window_bounds = array<i64: 32, 16>}]} {
    %c0 = arith.constant 0 : index
    %c0_0 = arith.constant 0 : index
    %0 = vector.load %arg1[%c0, %c0_0] : memref<32x16xf32, #tpu.memory_space<vmem>>, vector<32x16xf32>
    %cst = arith.constant 1.920000e+02 : f32
    %1 = vector.broadcast %cst : f32 to vector<32x16xf32>
    %2 = arith.cmpf olt, %0, %1 : vector<32x16xf32>
    %cst_1 = arith.constant 0.000000e+00 : f32
    %3 = vector.broadcast %cst_1 : f32 to vector<32x16xf32>
    %4 = arith.cmpf ogt, %0, %3 : vector<32x16xf32>
    %5 = arith.andi %2, %4 : vector<32x16xi1>
    %6 = arith.extui %5 : vector<32x16xi1> to vector<32x16xi8>
    %c0_2 = arith.constant 0 : index
    %c0_3 = arith.constant 0 : index
    %7 = vector.load %arg2[%c0_2, %c0_3] : memref<32x16xi8, #tpu.memory_space<vmem>>, vector<32x16xi8>
    tpu.vector_store %arg2[%c0_2, %c0_3], %6 {strides = array<i32>} : memref<32x16xi8, #tpu.memory_space<vmem>>, vector<32x16xi8>,
    return
  }
  func.func @transform_0(%arg0: i32) -> (i32, i32) {
    %c0_i32 = arith.constant 0 : i32
    %c0_i32_0 = arith.constant 0 : i32
    return %arg0, %c0_i32 : i32, i32
  }
  func.func @transform_1(%arg0: i32) -> (i32, i32) {
    %c0_i32 = arith.constant 0 : i32
    %c0_i32_0 = arith.constant 0 : i32
    return %arg0, %c0_i32 : i32, i32
  }
}

</mosaic_0001>

<llo_original>
// kernel: _disp_valid_mask_i8.1
$region0: #{_disp_valid_mask_i8.1}
  #allocation0 [shape = 'u32[]', space=smem, size = 0x4, offset = 0x4, fixed_abs, tag = 'smem constant byte address 0x4 - core index']
  #allocation1 [shape = 'u32[144,128]{1,0:T(1,128)}', space=vmem, size = 0x12000, scoped, tag = 'internal scratch']
  %s0 = inlined_call_operand.hbm [shape: f32[32,16], index: 0, kind: input, shape index: {}]
  %s1 = inlined_call_operand.hbm [shape: s8[32,16], index: 1, kind: output, shape index: {}]
  %s2 = sld [smem:[#allocation0]]
  $region18: #{_disp_valid_mask_i8.1} parent=0
    _
  %s4 = ssub.s32 1, %s2
  %s5 = scalar_select 0, %s4, %s2
  $region1: #{_disp_valid_mask_i8.1} parent=0
    #allocation2 [shape = 'u8[16384]{0}', space=vmem, size = 0x4000, scoped, tag = 'input window, operand 0, single buffered']
    #allocation3 [shape = 's32[1]{0}', space=sflag, size = 0x4, scoped, tag = 'scoped memory for _disp_valid_mask_i8.1']
    #allocation4 [shape = 's32[1]{0}', space=sflag, size = 0x4, scoped, tag = 'scoped memory for _disp_valid_mask_i8.1']
    #allocation5 [shape = 'u8[4096]{0}', space=vmem, size = 0x1000, scoped, tag = 'output window, operand 0, single buffered']
    %6 = vsyncpa [#allocation3], 0
    %7 = vsyncpa [#allocation4], 0
    // Predicated region
    $region2: #{_disp_valid_mask_i8.1} parent=1 // pred_check
      _
    $region3: #{_disp_valid_mask_i8.1} parent=1 // pred_check_branch
      %9 = sbr.rel (0) target = $region5
    $region4: #{_disp_valid_mask_i8.1} parent=1 // pred_region
      %s11 = ssub.s32 512, 512
      %12 = vsyncadd [#allocation3], %s11
      %s13 = sshll.u32 [#allocation2], 4
      %s14 = int_to_ptr.vmem [resolvable:$true] %s13
      %19 = dma.hbm_to_vmem [thread:$0]  %s0, 512, %s14, [#allocation3], 128, 128, 8
    $region5: #{_disp_valid_mask_i8.1} parent=1 // pred_fallthru
      _
    // Predicated region
    $region6: #{_disp_valid_mask_i8.1} parent=1 // pred_check
      _
    $region7: #{_disp_valid_mask_i8.1} parent=1 // pred_check_branch
      %21 = sbr.rel (0) target = $region9
    $region8: #{_disp_valid_mask_i8.1} parent=1 // pred_region
      %22 = dma.done [#allocation3], 512
    $region9: #{_disp_valid_mask_i8.1} parent=1 // pred_fallthru
      _
    %v25 = vld [vmem:[#allocation2] sm:$0xff]
    %v26 = vld [vmem:[#allocation2 + $0x8] sm:$0xff]
    %v27 = vld [vmem:[#allocation2 + $0x10] sm:$0xff]
    %v28 = vld [vmem:[#allocation2 + $0x18] sm:$0xff]
    %vm29 = vcmp.lt.f32.partialorder %v25, 192.0
    %vm30 = vcmp.lt.f32.partialorder %v26, 192.0
    %vm31 = vcmp.lt.f32.partialorder %v27, 192.0
    %vm32 = vcmp.lt.f32.partialorder %v28, 192.0
    %vm33 = vcmp.gt.f32.partialorder %v25, 0.0
    %vm34 = vcmp.gt.f32.partialorder %v26, 0.0
    %vm35 = vcmp.gt.f32.partialorder %v27, 0.0
    %vm36 = vcmp.gt.f32.partialorder %v28, 0.0
    %vm37 = vmand %vm29, %vm33
    %vm38 = vmand %vm30, %vm34
    %vm39 = vmand %vm31, %vm35
    %vm40 = vmand %vm32, %vm36
    %vm41 = vmpackc.low %vm38, %vm37
    %vm42 = vmpackc.low %vm40, %vm39
    %vm43 = vmpackc.even %vm42, %vm41
    %v44 = vsel %vm43, 16843009, 0
    %v45 = vunpack.c.0.s8 %v44
    %v46 = vunpack.c.1.s8 %v44
    %v47 = vunpack.c.2.s8 %v44
    %v48 = vunpack.c.3.s8 %v44
    %v49 = vpack.c.b16 %v45, %v45
    %v50 = vpack.c.b8 %v49, %v49
    %v51 = vpack.c.b16 %v46, %v46
    %v52 = vpack.c.b8 %v51, %v51
    %v53 = vpack.c.b16 %v47, %v47
    %v54 = vpack.c.b8 %v53, %v53
    %v55 = vpack.c.b16 %v48, %v48
    %v56 = vpack.c.b8 %v55, %v55
    %vm57 = vcmask 123904
    %58 = vst.msk [vmem:[#allocation5] sm:$0x3] %vm57, %v50
    %59 = vst.msk [vmem:[#allocation5 + $0x2] sm:$0x3] %vm57, %v52
    %60 = vst.msk [vmem:[#allocation5 + $0x4] sm:$0x3] %vm57, %v54
    %61 = vst.msk [vmem:[#allocation5 + $0x6] sm:$0x3] %vm57, %v56
    // Predicated region
    $region10: #{_disp_valid_mask_i8.1} parent=1 // pred_check
      _
    $region11: #{_disp_valid_mask_i8.1} parent=1 // pred_check_branch
      %63 = sbr.rel (0) target = $region13
    $region12: #{_disp_valid_mask_i8.1} parent=1 // pred_region
      %s65 = ssub.s32 128, 128
      %66 = vsyncadd [#allocation4], %s65
      %s67 = sshll.u32 [#allocation5], 4
      %s68 = int_to_ptr.vmem [resolvable:$true] %s67
      %73 = dma.vmem_to_hbm [thread:$0]  %s68, 128, %s1, [#allocation4], 32, 32, 2
    $region13: #{_disp_valid_mask_i8.1} parent=1 // pred_fallthru
      _
    // Predicated region
    $region14: #{_disp_valid_mask_i8.1} parent=1 // pred_check
      _
    $region15: #{_disp_valid_mask_i8.1} parent=1 // pred_check_branch
      %75 = sbr.rel (0) target = $region17
    $region16: #{_disp_valid_mask_i8.1} parent=1 // pred_region
      %76 = dma.done [#allocation4], 128
    $region17: #{_disp_valid_mask_i8.1} parent=1 // pred_fallthru
      _
    %77 = vsyncpa [#allocation3], 1
    %78 = vsyncpa [#allocation4], 1

</llo_original>
